<compile_context>
chip_gen: v6e
topology: v6e:2x2x1
jax: 0.10.0
libtpu: 0.0.40
codegen_flags: <defaults>
</compile_context>

<pallas_src>
import jax
import jax.numpy as jnp
from jax.experimental import pallas as pl
from jax.experimental.pallas import tpu as pltpu


BN_EPS = 1e-5


# ---------------------------------------------------------------------------
# Fused Pallas kernel
# ---------------------------------------------------------------------------

def _make_fused_decoder_kernel(n_bn_layers):
    """Build a kernel computing the whole decoder for a (tm, K0) row-block of z.

    Ref layout (positional):
      x_ref,
      [w_folded_ref, shift_ref] * n_bn_layers,
      w_out_ref, b_out_ref,
      o_ref
    """

    def kernel(*refs):
        x_ref = refs[0]
        o_ref = refs[-1]

        h = x_ref[...].astype(jnp.float32)
        idx = 1
        for _ in range(n_bn_layers):
            w_ref = refs[idx]
            shift_ref = refs[idx + 1]
            idx += 2
            # Linear (BN scale pre-folded into W) + BN shift + LeakyReLU(0.3).
            h = jnp.dot(h, w_ref[...], preferred_element_type=jnp.float32)
            h = h + shift_ref[...]
            h = jnp.maximum(h, 0.3 * h)
            # Dropout: eval-mode identity.

        w_out_ref = refs[idx]
        b_out_ref = refs[idx + 1]
        h = jnp.dot(h, w_out_ref[...], preferred_element_type=jnp.float32)
        o_ref[...] = (h + b_out_ref[...]).astype(o_ref.dtype)

    return kernel


# ---------------------------------------------------------------------------
# Decoder parameter construction + forward
# ---------------------------------------------------------------------------

def init_decoder_params(key, z_dimension, layer_sizes, x_dimension):
    """Deterministic synthetic parameters mirroring the PyTorch module's shapes.

    Weights are stored as (in_features, out_features) so layers are `x @ W`.
    Eval-mode BN is folded: w_folded = W * scale, shift = beta - mean * scale.
    """
    del x_dimension  # unused by the original module's output layer (reproduced)
    ls = [z_dimension] + list(layer_sizes)

    params = {"bn_layers": [], "recon": None}

    def bn_layer(k, in_size, out_size):
        k_w, k_g, k_b, k_m, k_v = jax.random.split(k, 5)
        w = jax.random.normal(k_w, (in_size, out_size), jnp.float32) * 0.05
        gamma = 1.0 + 0.1 * jax.random.normal(k_g, (out_size,), jnp.float32)
        beta = 0.1 * jax.random.normal(k_b, (out_size,), jnp.float32)
        run_mean = 0.1 * jax.random.normal(k_m, (out_size,), jnp.float32)
        run_var = jnp.abs(1.0 + 0.1 * jax.random.normal(k_v, (out_size,), jnp.float32))
        scale = gamma / jnp.sqrt(run_var + BN_EPS)
        shift = beta - run_mean * scale
        return {
            "w": w,                              # unfolded (reference)
            "scale": scale,                      # unfolded (reference)
            "shift": shift.reshape(1, -1),       # used by kernel
            "w_folded": w * scale[None, :],      # used by kernel
        }

    keys = jax.random.split(key, len(ls) + 1)

    # FirstL: ls[0] -> ls[1]
    params["bn_layers"].append(bn_layer(keys[0], ls[0], ls[1]))

    # HiddenL: pairs (ls[1], ls[2]), ... included only while i + 3 < len(ls)
    if len(ls) > 2:
        for i, (in_size, out_size) in enumerate(zip(ls[1:-1], ls[2:])):
            if i + 3 < len(ls):
                params["bn_layers"].append(bn_layer(keys[i + 1], in_size, out_size))

    # recon_decoder: Linear(ls[-2], ls[-1]) with bias
    k_w, k_b = jax.random.split(keys[-1])
    w_out = jax.random.normal(k_w, (ls[-2], ls[-1]), jnp.float32) * 0.05
    b_out = 0.1 * jax.random.normal(k_b, (ls[-1],), jnp.float32)
    params["recon"] = {"w": w_out, "b": b_out.reshape(1, -1)}
    return params


def decoder_forward(params, z):
    """Single fused pallas_call for the whole decoder."""
    bn_layers = params["bn_layers"]
    n_bn = len(bn_layers)
    M, K0 = z.shape
    n_out = params["recon"]["w"].shape[1]

    # Grid over batch rows: 128-row blocks for large batches (lane/sublane
    # friendly, shards across v7x's 2 TensorCores); whole batch for small M.
    if M > 128 and M % 128 == 0:
        tm = 128
    else:
        tm = M
    grid = (M // tm,)

    in_specs = [pl.BlockSpec((tm, K0), lambda i: (i, 0))]
    operands = [z]
    for layer in bn_layers:
        kin, kout = layer["w_folded"].shape
        in_specs.append(pl.BlockSpec((kin, kout), lambda i: (0, 0)))
        in_specs.append(pl.BlockSpec((1, kout), lambda i: (0, 0)))
        operands.append(layer["w_folded"])
        operands.append(layer["shift"])
    kin, kout = params["recon"]["w"].shape
    in_specs.append(pl.BlockSpec((kin, kout), lambda i: (0, 0)))
    in_specs.append(pl.BlockSpec((1, kout), lambda i: (0, 0)))
    operands.append(params["recon"]["w"])
    operands.append(params["recon"]["b"])

    return pl.pallas_call(
        _make_fused_decoder_kernel(n_bn),
        out_shape=jax.ShapeDtypeStruct((M, n_out), z.dtype),
        grid=grid,
        in_specs=in_specs,
        out_specs=pl.BlockSpec((tm, n_out), lambda i: (i, 0)),
        compiler_params=pltpu.CompilerParams(
            dimension_semantics=("parallel",),
        ),
    )(*operands)


def decoder_forward_ref(params, z):
    """Pure-JAX reference using the UNFOLDED BN params (checks the fold too)."""
    x = z
    for layer in params["bn_layers"]:
        h = x @ layer["w"]
        h = h * layer["scale"][None, :] + layer["shift"]
        x = jnp.where(h >= 0.0, h, 0.3 * h)
    return x @ params["recon"]["w"] + params["recon"]["b"]


# ---------------------------------------------------------------------------
# Main
# ---------------------------------------------------------------------------

if __name__ == "__main__":
    key = jax.random.PRNGKey(0)
    k_param, k_z = jax.random.split(key)

    batch = 8
    z_dimension = 32
    layer_sizes = [64, 64, 128]   # hidden sizes; module prepends z_dimension
    x_dimension = 128             # unused by the original module's output layer
    dropout_rate = 0.2            # eval-mode -> identity

    params = init_decoder_params(k_param, z_dimension, layer_sizes, x_dimension)
    z = jax.random.normal(k_z, (batch, z_dimension), jnp.float32)

    out = decoder_forward(params, z)
    out = jax.block_until_ready(out)

    ref = decoder_forward_ref(params, z)
    assert out.shape == (batch, layer_sizes[-1]), out.shape
    assert jnp.allclose(out, ref, atol=1e-4, rtol=1e-4), "mismatch vs reference"

    print("KERNEL_OK")
</pallas_src>

<mosaic_0001>
module attributes {stable_mosaic.version = 11 : i64} {
  func.func @kernel(%arg0: i32, %arg1: memref<8x32xf32, #tpu.memory_space<vmem>>, %arg2: memref<32x64xf32, #tpu.memory_space<vmem>>, %arg3: memref<1x64xf32, #tpu.memory_space<vmem>>, %arg4: memref<64x64xf32, #tpu.memory_space<vmem>>, %arg5: memref<1x64xf32, #tpu.memory_space<vmem>>, %arg6: memref<64x128xf32, #tpu.memory_space<vmem>>, %arg7: memref<1x128xf32, #tpu.memory_space<vmem>>, %arg8: memref<8x128xf32, #tpu.memory_space<vmem>>) attributes {dimension_semantics = [#tpu.dimension_semantics<parallel>], iteration_bounds = array<i64: 1>, scalar_prefetch = 0 : i64, scratch_operands = 0 : i64, tpu.core_type = #tpu.core_type<tc>, window_params = [{transform_indices = @transform_0, window_bounds = array<i64: 8, 32>}, {pipeline_mode = #tpu.pipeline_mode<synchronous>, transform_indices = @transform_1, window_bounds = array<i64: 32, 64>}, {pipeline_mode = #tpu.pipeline_mode<synchronous>, transform_indices = @transform_2, window_bounds = array<i64: 1, 64>}, {pipeline_mode = #tpu.pipeline_mode<synchronous>, transform_indices = @transform_3, window_bounds = array<i64: 64, 64>}, {pipeline_mode = #tpu.pipeline_mode<synchronous>, transform_indices = @transform_4, window_bounds = array<i64: 1, 64>}, {pipeline_mode = #tpu.pipeline_mode<synchronous>, transform_indices = @transform_5, window_bounds = array<i64: 64, 128>}, {pipeline_mode = #tpu.pipeline_mode<synchronous>, transform_indices = @transform_6, window_bounds = array<i64: 1, 128>}, {transform_indices = @transform_7, window_bounds = array<i64: 8, 128>}]} {
    %c0 = arith.constant 0 : index
    %c0_0 = arith.constant 0 : index
    %0 = vector.load %arg1[%c0, %c0_0] : memref<8x32xf32, #tpu.memory_space<vmem>>, vector<8x32xf32>
    %c0_1 = arith.constant 0 : index
    %c0_2 = arith.constant 0 : index
    %1 = vector.load %arg2[%c0_1, %c0_2] : memref<32x64xf32, #tpu.memory_space<vmem>>, vector<32x64xf32>
    %cst = arith.constant dense<0.000000e+00> : vector<8x64xf32>
    %2 = tpu.matmul %0, %1, %cst {dimension_numbers = #tpu.dot_dimension_numbers<[1], [0], [0], [1], [0, 0, 1, 1], [], []>} : vector<8x32xf32>, vector<32x64xf32>, vector<8x64xf32> -> vector<8x64xf32>
    %c0_3 = arith.constant 0 : index
    %c0_4 = arith.constant 0 : index
    %3 = vector.load %arg3[%c0_3, %c0_4] : memref<1x64xf32, #tpu.memory_space<vmem>>, vector<1x64xf32>
    %4 = vector.broadcast %3 : vector<1x64xf32> to vector<8x64xf32>
    %5 = arith.addf %2, %4 : vector<8x64xf32>
    %cst_5 = arith.constant 3.000000e-01 : f32
    %6 = vector.broadcast %cst_5 : f32 to vector<8x64xf32>
    %7 = arith.mulf %6, %5 : vector<8x64xf32>
    %8 = arith.maximumf %5, %7 : vector<8x64xf32>
    %c0_6 = arith.constant 0 : index
    %c0_7 = arith.constant 0 : index
    %9 = vector.load %arg4[%c0_6, %c0_7] : memref<64x64xf32, #tpu.memory_space<vmem>>, vector<64x64xf32>
    %cst_8 = arith.constant dense<0.000000e+00> : vector<8x64xf32>
    %10 = tpu.matmul %8, %9, %cst_8 {dimension_numbers = #tpu.dot_dimension_numbers<[1], [0], [0], [1], [0, 0, 1, 1], [], []>} : vector<8x64xf32>, vector<64x64xf32>, vector<8x64xf32> -> vector<8x64xf32>
    %c0_9 = arith.constant 0 : index
    %c0_10 = arith.constant 0 : index
    %11 = vector.load %arg5[%c0_9, %c0_10] : memref<1x64xf32, #tpu.memory_space<vmem>>, vector<1x64xf32>
    %12 = vector.broadcast %11 : vector<1x64xf32> to vector<8x64xf32>
    %13 = arith.addf %10, %12 : vector<8x64xf32>
    %cst_11 = arith.constant 3.000000e-01 : f32
    %14 = vector.broadcast %cst_11 : f32 to vector<8x64xf32>
    %15 = arith.mulf %14, %13 : vector<8x64xf32>
    %16 = arith.maximumf %13, %15 : vector<8x64xf32>
    %c0_12 = arith.constant 0 : index
    %c0_13 = arith.constant 0 : index
    %17 = vector.load %arg6[%c0_12, %c0_13] : memref<64x128xf32, #tpu.memory_space<vmem>>, vector<64x128xf32>
    %cst_14 = arith.constant dense<0.000000e+00> : vector<8x128xf32>
    %18 = tpu.matmul %16, %17, %cst_14 {dimension_numbers = #tpu.dot_dimension_numbers<[1], [0], [0], [1], [0, 0, 1, 1], [], []>} : vector<8x64xf32>, vector<64x128xf32>, vector<8x128xf32> -> vector<8x128xf32>
    %c0_15 = arith.constant 0 : index
    %c0_16 = arith.constant 0 : index
    %19 = vector.load %arg7[%c0_15, %c0_16] : memref<1x128xf32, #tpu.memory_space<vmem>>, vector<1x128xf32>
    %20 = vector.broadcast %19 : vector<1x128xf32> to vector<8x128xf32>
    %21 = arith.addf %18, %20 : vector<8x128xf32>
    %c0_17 = arith.constant 0 : index
    %c0_18 = arith.constant 0 : index
    %22 = vector.load %arg8[%c0_17, %c0_18] : memref<8x128xf32, #tpu.memory_space<vmem>>, vector<8x128xf32>
    tpu.vector_store %arg8[%c0_17, %c0_18], %21 {strides = array<i32>} : memref<8x128xf32, #tpu.memory_space<vmem>>, vector<8x128xf32>,
    return
  }
  func.func @transform_0(%arg0: i32) -> (i32, i32) {
    %c0_i32 = arith.constant 0 : i32
    %c0_i32_0 = arith.constant 0 : i32
    return %arg0, %c0_i32 : i32, i32
  }
  func.func @transform_1(%arg0: i32) -> (i32, i32) {
    %c0_i32 = arith.constant 0 : i32
    %c0_i32_0 = arith.constant 0 : i32
    %c0_i32_1 = arith.constant 0 : i32
    return %c0_i32, %c0_i32_0 : i32, i32
  }
  func.func @transform_2(%arg0: i32) -> (i32, i32) {
    %c0_i32 = arith.constant 0 : i32
    %c0_i32_0 = arith.constant 0 : i32
    %c0_i32_1 = arith.constant 0 : i32
    return %c0_i32, %c0_i32_0 : i32, i32
  }
  func.func @transform_3(%arg0: i32) -> (i32, i32) {
    %c0_i32 = arith.constant 0 : i32
    %c0_i32_0 = arith.constant 0 : i32
    %c0_i32_1 = arith.constant 0 : i32
    return %c0_i32, %c0_i32_0 : i32, i32
  }
  func.func @transform_4(%arg0: i32) -> (i32, i32) {
    %c0_i32 = arith.constant 0 : i32
    %c0_i32_0 = arith.constant 0 : i32
    %c0_i32_1 = arith.constant 0 : i32
    return %c0_i32, %c0_i32_0 : i32, i32
  }
  func.func @transform_5(%arg0: i32) -> (i32, i32) {
    %c0_i32 = arith.constant 0 : i32
    %c0_i32_0 = arith.constant 0 : i32
    %c0_i32_1 = arith.constant 0 : i32
    return %c0_i32, %c0_i32_0 : i32, i32
  }
  func.func @transform_6(%arg0: i32) -> (i32, i32) {
    %c0_i32 = arith.constant 0 : i32
    %c0_i32_0 = arith.constant 0 : i32
    %c0_i32_1 = arith.constant 0 : i32
    return %c0_i32, %c0_i32_0 : i32, i32
  }
  func.func @transform_7(%arg0: i32) -> (i32, i32) {
    %c0_i32 = arith.constant 0 : i32
    %c0_i32_0 = arith.constant 0 : i32
    return %arg0, %c0_i32 : i32, i32
  }
}

</mosaic_0001>

<llo_original>
// kernel: tpu_custom_call.1
$region0: #{tpu_custom_call.1}
  #allocation0 [shape = 'u32[]', space=smem, size = 0x4, offset = 0x4, fixed_abs, tag = 'smem constant byte address 0x4 - core index']
  #allocation1 [shape = 'u32[144,128]{1,0:T(1,128)}', space=vmem, size = 0x12000, scoped, tag = 'internal scratch']
  %s0 = inlined_call_operand.hbm [shape: f32[8,32], index: 0, kind: input, shape index: {}]
  %s1 = inlined_call_operand.hbm [shape: f32[32,64], index: 1, kind: input, shape index: {}]
  %s2 = inlined_call_operand.vmem [shape: f32[1,64], index: 2, kind: input, shape index: {}]
  %s3 = inlined_call_operand.hbm [shape: f32[64,64], index: 3, kind: input, shape index: {}]
  %s4 = inlined_call_operand.vmem [shape: f32[1,64], index: 4, kind: input, shape index: {}]
  %s5 = inlined_call_operand.hbm [shape: f32[64,128], index: 5, kind: input, shape index: {}]
  %s6 = inlined_call_operand.vmem [shape: f32[1,128], index: 6, kind: input, shape index: {}]
  %s7 = inlined_call_operand.hbm [shape: f32[8,128], index: 7, kind: output, shape index: {}]
  %s8 = sld [smem:[#allocation0]]
  $region54: #{tpu_custom_call.1} parent=0
    _
  %s10 = ssub.s32 1, %s8
  %s11 = scalar_select 0, %s10, %s8
  $region1: #{tpu_custom_call.1} parent=0
    #allocation2 [shape = 'u8[4096]{0}', space=vmem, size = 0x1000, scoped, tag = 'input window, operand 0, single buffered']
    #allocation3 [shape = 's32[1]{0}', space=sflag, size = 0x4, scoped, tag = 'scoped memory for tpu_custom_call.1']
    #allocation4 [shape = 's32[1]{0}', space=sflag, size = 0x4, scoped, tag = 'scoped memory for tpu_custom_call.1']
    #allocation5 [shape = 'u8[16384]{0}', space=vmem, size = 0x4000, scoped, tag = 'input window, operand 1, single buffered']
    #allocation6 [shape = 's32[1]{0}', space=sflag, size = 0x4, scoped, tag = 'scoped memory for tpu_custom_call.1']
    #allocation7 [shape = 'u8[32768]{0}', space=vmem, size = 0x8000, scoped, tag = 'input window, operand 3, single buffered']
    #allocation8 [shape = 'u8[32768]{0}', space=vmem, size = 0x8000, scoped, tag = 'input window, operand 5, single buffered']
    #allocation9 [shape = 's32[1]{0}', space=sflag, size = 0x4, scoped, tag = 'scoped memory for tpu_custom_call.1']
    #allocation10 [shape = 'u8[4096]{0}', space=vmem, size = 0x1000, scoped, tag = 'output window, operand 0, single buffered']
    %12 = vsyncpa [#allocation3], 0
    %13 = vsyncpa [#allocation6], 0
    %14 = vsyncpa [#allocation9], 0
    %15 = vsyncpa [#allocation4], 0
    // Predicated region
    $region2: #{tpu_custom_call.1} parent=1 // pred_check
      _
    $region3: #{tpu_custom_call.1} parent=1 // pred_check_branch
      %17 = sbr.rel (0) target = $region5
    $region4: #{tpu_custom_call.1} parent=1 // pred_region
      %s19 = ssub.s32 128, 128
      %20 = vsyncadd [#allocation3], %s19
      %s22 = sshll.u32 [#allocation2], 4
      %s23 = int_to_ptr.vmem [resolvable:$true] %s22
      %25 = dma.hbm_to_vmem [thread:$0]  %s0, 128, %s23, [#allocation3]
    $region5: #{tpu_custom_call.1} parent=1 // pred_fallthru
      _
    // Predicated region
    $region6: #{tpu_custom_call.1} parent=1 // pred_check
      _
    $region7: #{tpu_custom_call.1} parent=1 // pred_check_branch
      %27 = sbr.rel (0) target = $region9
    $region8: #{tpu_custom_call.1} parent=1 // pred_region
      %s29 = ssub.s32 512, 512
      %30 = vsyncadd [#allocation6], %s29
      %s31 = sshll.u32 [#allocation5], 4
      %s32 = int_to_ptr.vmem [resolvable:$true] %s31
      %37 = dma.hbm_to_vmem [thread:$0]  %s1, 512, %s32, [#allocation6], 128, 128, 8
    $region9: #{tpu_custom_call.1} parent=1 // pred_fallthru
      _
    // Predicated region
    $region10: #{tpu_custom_call.1} parent=1 // pred_check
      _
    $region11: #{tpu_custom_call.1} parent=1 // pred_check_branch
      %39 = sbr.rel (0) target = $region13
    $region12: #{tpu_custom_call.1} parent=1 // pred_region
      _
    $region13: #{tpu_custom_call.1} parent=1 // pred_fallthru
      _
    // Predicated region
    $region14: #{tpu_custom_call.1} parent=1 // pred_check
      _
    $region15: #{tpu_custom_call.1} parent=1 // pred_check_branch
      %41 = sbr.rel (0) target = $region17
    $region16: #{tpu_custom_call.1} parent=1 // pred_region
      %s43 = ssub.s32 1024, 1024
      %44 = vsyncadd [#allocation6], %s43
      %s45 = sshll.u32 [#allocation7], 4
      %s46 = int_to_ptr.vmem [resolvable:$true] %s45
      %51 = dma.hbm_to_vmem [thread:$0]  %s3, 1024, %s46, [#allocation6], 128, 128, 8
    $region17: #{tpu_custom_call.1} parent=1 // pred_fallthru
      _
    // Predicated region
    $region18: #{tpu_custom_call.1} parent=1 // pred_check
      _
    $region19: #{tpu_custom_call.1} parent=1 // pred_check_branch
      %53 = sbr.rel (0) target = $region21
    $region20: #{tpu_custom_call.1} parent=1 // pred_region
      _
    $region21: #{tpu_custom_call.1} parent=1 // pred_fallthru
      _
    // Predicated region
    $region22: #{tpu_custom_call.1} parent=1 // pred_check
      _
    $region23: #{tpu_custom_call.1} parent=1 // pred_check_branch
      %55 = sbr.rel (0) target = $region25
    $region24: #{tpu_custom_call.1} parent=1 // pred_region
      %s57 = ssub.s32 1024, 1024
      %58 = vsyncadd [#allocation9], %s57
      %s59 = sshll.u32 [#allocation8], 4
      %s60 = int_to_ptr.vmem [resolvable:$true] %s59
      %65 = dma.hbm_to_vmem [thread:$0]  %s5, 1024, %s60, [#allocation9], 128, 128, 8
    $region25: #{tpu_custom_call.1} parent=1 // pred_fallthru
      _
    // Predicated region
    $region26: #{tpu_custom_call.1} parent=1 // pred_check
      _
    $region27: #{tpu_custom_call.1} parent=1 // pred_check_branch
      %67 = sbr.rel (0) target = $region29
    $region28: #{tpu_custom_call.1} parent=1 // pred_region
      _
    $region29: #{tpu_custom_call.1} parent=1 // pred_fallthru
      _
    // Predicated region
    $region30: #{tpu_custom_call.1} parent=1 // pred_check
      _
    $region31: #{tpu_custom_call.1} parent=1 // pred_check_branch
      %69 = sbr.rel (0) target = $region33
    $region32: #{tpu_custom_call.1} parent=1 // pred_region
      %70 = dma.done [#allocation3], 128
    $region33: #{tpu_custom_call.1} parent=1 // pred_fallthru
      _
    // Predicated region
    $region34: #{tpu_custom_call.1} parent=1 // pred_check
      _
    $region35: #{tpu_custom_call.1} parent=1 // pred_check_branch
      %72 = sbr.rel (0) target = $region37
    $region36: #{tpu_custom_call.1} parent=1 // pred_region
      %73 = dma.done [#allocation6], 512
    $region37: #{tpu_custom_call.1} parent=1 // pred_fallthru
      _
    // Predicated region
    $region38: #{tpu_custom_call.1} parent=1 // pred_check
      _
    $region39: #{tpu_custom_call.1} parent=1 // pred_check_branch
      %75 = sbr.rel (0) target = $region41
    $region40: #{tpu_custom_call.1} parent=1 // pred_region
      %76 = dma.done [#allocation6], 1024
    $region41: #{tpu_custom_call.1} parent=1 // pred_fallthru
      _
    // Predicated region
    $region42: #{tpu_custom_call.1} parent=1 // pred_check
      _
    $region43: #{tpu_custom_call.1} parent=1 // pred_check_branch
      %78 = sbr.rel (0) target = $region45
    $region44: #{tpu_custom_call.1} parent=1 // pred_region
      %79 = dma.done [#allocation9], 1024
    $region45: #{tpu_custom_call.1} parent=1 // pred_fallthru
      _
    %v80 = vld [vmem:[#allocation2] sm:$0xff]
    %v81 = vld [vmem:[#allocation5] sm:$0xff]
    %v82 = vld [vmem:[#allocation5 + $0x8] sm:$0xff]
    %v83 = vld [vmem:[#allocation5 + $0x10] sm:$0xff]
    %v84 = vld [vmem:[#allocation5 + $0x18] sm:$0xff]
    %v85 = vld [vmem:[%s2] sm:$0x1]
    %v87 = vlaneseq
    %v88 = vshrl.u32 %v87, 7
    %v89 = vsub.s32 0, %v88
    %v90 = vrot.slane %v85, %v89
    %vm92 = vcmask 261120
    %v94 = vsel %vm92, %v80, 0
    %96 = vmatprep.subr.mxu0 0.0
    %97 = vmatpush1.msra.mxu0 0.0
    %98 = vmatprep.subr.mxu0 0.0
    %99 = vmatpush1.msra.mxu0 0.0
    %100 = vmatprep.subr.mxu0 0.0
    %101 = vmatpush1.msra.mxu0 0.0
    %102 = vmatprep.subr.mxu0 0.0
    %103 = vmatpush1.msra.mxu0 0.0
    %104 = vmatprep.subr.mxu0 0.0
    %105 = vmatpush1.msra.mxu0 0.0
    %106 = vmatprep.subr.mxu0 0.0
    %107 = vmatpush1.msra.mxu0 0.0
    %108 = vmatprep.subr.mxu0 0.0
    %109 = vmatpush1.msra.mxu0 0.0
    %110 = vmatprep.subr.mxu0 0.0
    %111 = vmatpush1.msra.mxu0 0.0
    %112 = vmatprep.subr.mxu0 0.0
    %113 = vmatpush1.msra.mxu0 0.0
    %114 = vmatprep.subr.mxu0 0.0
    %115 = vmatpush1.msra.mxu0 0.0
    %116 = vmatprep.subr.mxu0 0.0
    %117 = vmatpush1.msra.mxu0 0.0
    %118 = vmatprep.subr.mxu0 0.0
    %119 = vmatpush1.msra.mxu0 0.0
    %120 = vmatprep.subr.mxu0 0.0
    %121 = vmatpush1.msra.mxu0 %v84
    %122 = vmatprep.subr.mxu0 0.0
    %123 = vmatpush1.msra.mxu0 %v83
    %124 = vmatprep.subr.mxu0 0.0
    %125 = vmatpush1.msra.mxu0 %v82
    %126 = vmatprep.subr.mxu0 0.0
    %127 = vmatpush1.msra.mxu0 %v81
    %128 = vmatprep.subr.mxu0 0.0
    %129 = vmatpush2.msra.mxu0 0.0
    %130 = vmatprep.subr.mxu0 0.0
    %131 = vmatpush2.msra.mxu0 0.0
    %132 = vmatprep.subr.mxu0 0.0
    %133 = vmatpush2.msra.mxu0 0.0
    %134 = vmatprep.subr.mxu0 0.0
    %135 = vmatpush2.msra.mxu0 0.0
    %136 = vmatprep.subr.mxu0 0.0
    %137 = vmatpush2.msra.mxu0 0.0
    %138 = vmatprep.subr.mxu0 0.0
    %139 = vmatpush2.msra.mxu0 0.0
    %140 = vmatprep.subr.mxu0 0.0
    %141 = vmatpush2.msra.mxu0 0.0
    %142 = vmatprep.subr.mxu0 0.0
    %143 = vmatpush2.msra.mxu0 0.0
    %144 = vmatprep.subr.mxu0 0.0
    %145 = vmatpush2.msra.mxu0 0.0
    %146 = vmatprep.subr.mxu0 0.0
    %147 = vmatpush2.msra.mxu0 0.0
    %148 = vmatprep.subr.mxu0 0.0
    %149 = vmatpush2.msra.mxu0 0.0
    %150 = vmatprep.subr.mxu0 0.0
    %151 = vmatpush2.msra.mxu0 0.0
    %152 = vmatprep.subr.mxu0 0.0
    %153 = vmatpush2.msra.mxu0 0.0
    %154 = vmatprep.subr.mxu0 0.0
    %155 = vmatpush2.msra.mxu0 0.0
    %156 = vmatprep.subr.mxu0 0.0
    %157 = vmatpush2.msra.mxu0 0.0
    %158 = vmatprep.subr.mxu0 0.0
    %159 = vmatpush2.msra.mxu0 0.0
    %160 = vmatprep.mubr.f32.mxu0 0.0
    %161 = vmatmul.mubr.f32.gmra.mxu0 %v94
    %v162 = vpop.f32.mrf.mxu0
    %v163 = vadd.f32 %v90, %v162
    %v164 = vpop.f32.mrf.mxu0
    %165 = vdwg.mxu0
    %v166 = vmul.f32 %v163, 0.3
    %v167 = vmax.f32 %v163, %v166
    %v168 = vld [vmem:[#allocation7] sm:$0xff]
    %v169 = vld [vmem:[#allocation7 + $0x8] sm:$0xff]
    %v170 = vld [vmem:[#allocation7 + $0x10] sm:$0xff]
    %v171 = vld [vmem:[#allocation7 + $0x18] sm:$0xff]
    %v172 = vld [vmem:[#allocation7 + $0x20] sm:$0xff]
    %v173 = vld [vmem:[#allocation7 + $0x28] sm:$0xff]
    %v174 = vld [vmem:[#allocation7 + $0x30] sm:$0xff]
    %v175 = vld [vmem:[#allocation7 + $0x38] sm:$0xff]
    %v176 = vld [vmem:[%s4] sm:$0x1]
    %v178 = vlaneseq
    %v179 = vshrl.u32 %v178, 7
    %v180 = vsub.s32 0, %v179
    %v181 = vrot.slane %v176, %v180
    %vm183 = vcmask 523264
    %v185 = vsel %vm183, %v167, 0
    %187 = vmatprep.subr.mxu0 0.0
    %188 = vmatpush1.msra.mxu0 0.0
    %189 = vmatprep.subr.mxu0 0.0
    %190 = vmatpush1.msra.mxu0 0.0
    %191 = vmatprep.subr.mxu0 0.0
    %192 = vmatpush1.msra.mxu0 0.0
    %193 = vmatprep.subr.mxu0 0.0
    %194 = vmatpush1.msra.mxu0 0.0
    %195 = vmatprep.subr.mxu0 0.0
    %196 = vmatpush1.msra.mxu0 0.0
    %197 = vmatprep.subr.mxu0 0.0
    %198 = vmatpush1.msra.mxu0 0.0
    %199 = vmatprep.subr.mxu0 0.0
    %200 = vmatpush1.msra.mxu0 0.0
    %201 = vmatprep.subr.mxu0 0.0
    %202 = vmatpush1.msra.mxu0 0.0
    %203 = vmatprep.subr.mxu0 0.0
    %204 = vmatpush1.msra.mxu0 %v175
    %205 = vmatprep.subr.mxu0 0.0
    %206 = vmatpush1.msra.mxu0 %v174
    %207 = vmatprep.subr.mxu0 0.0
    %208 = vmatpush1.msra.mxu0 %v173
    %209 = vmatprep.subr.mxu0 0.0
    %210 = vmatpush1.msra.mxu0 %v172
    %211 = vmatprep.subr.mxu0 0.0
    %212 = vmatpush1.msra.mxu0 %v171
    %213 = vmatprep.subr.mxu0 0.0
    %214 = vmatpush1.msra.mxu0 %v170
    %215 = vmatprep.subr.mxu0 0.0
    %216 = vmatpush1.msra.mxu0 %v169
    %217 = vmatprep.subr.mxu0 0.0
    %218 = vmatpush1.msra.mxu0 %v168
    %219 = vmatprep.subr.mxu0 0.0
    %220 = vmatpush2.msra.mxu0 0.0
    %221 = vmatprep.subr.mxu0 0.0
    %222 = vmatpush2.msra.mxu0 0.0
    %223 = vmatprep.subr.mxu0 0.0
    %224 = vmatpush2.msra.mxu0 0.0
    %225 = vmatprep.subr.mxu0 0.0
    %226 = vmatpush2.msra.mxu0 0.0
    %227 = vmatprep.subr.mxu0 0.0
    %228 = vmatpush2.msra.mxu0 0.0
    %229 = vmatprep.subr.mxu0 0.0
    %230 = vmatpush2.msra.mxu0 0.0
    %231 = vmatprep.subr.mxu0 0.0
    %232 = vmatpush2.msra.mxu0 0.0
    %233 = vmatprep.subr.mxu0 0.0
    %234 = vmatpush2.msra.mxu0 0.0
    %235 = vmatprep.subr.mxu0 0.0
    %236 = vmatpush2.msra.mxu0 0.0
    %237 = vmatprep.subr.mxu0 0.0
    %238 = vmatpush2.msra.mxu0 0.0
    %239 = vmatprep.subr.mxu0 0.0
    %240 = vmatpush2.msra.mxu0 0.0
    %241 = vmatprep.subr.mxu0 0.0
    %242 = vmatpush2.msra.mxu0 0.0
    %243 = vmatprep.subr.mxu0 0.0
    %244 = vmatpush2.msra.mxu0 0.0
    %245 = vmatprep.subr.mxu0 0.0
    %246 = vmatpush2.msra.mxu0 0.0
    %247 = vmatprep.subr.mxu0 0.0
    %248 = vmatpush2.msra.mxu0 0.0
    %249 = vmatprep.subr.mxu0 0.0
    %250 = vmatpush2.msra.mxu0 0.0
    %251 = vmatprep.mubr.f32.mxu0 0.0
    %252 = vmatmul.mubr.f32.gmra.mxu0 %v185
    %v253 = vpop.f32.mrf.mxu0
    %v254 = vadd.f32 %v181, %v253
    %v255 = vpop.f32.mrf.mxu0
    %256 = vdwg.mxu0
    %v257 = vmul.f32 %v254, 0.3
    %v258 = vmax.f32 %v254, %v257
    %v259 = vld [vmem:[#allocation8] sm:$0xff]
    %v260 = vld [vmem:[#allocation8 + $0x8] sm:$0xff]
    %v261 = vld [vmem:[#allocation8 + $0x10] sm:$0xff]
    %v262 = vld [vmem:[#allocation8 + $0x18] sm:$0xff]
    %v263 = vld [vmem:[#allocation8 + $0x20] sm:$0xff]
    %v264 = vld [vmem:[#allocation8 + $0x28] sm:$0xff]
    %v265 = vld [vmem:[#allocation8 + $0x30] sm:$0xff]
    %v266 = vld [vmem:[#allocation8 + $0x38] sm:$0xff]
    %v267 = vld [vmem:[%s6] sm:$0x1]
    %v269 = vlaneseq
    %v270 = vshrl.u32 %v269, 7
    %v271 = vsub.s32 0, %v270
    %v272 = vrot.slane %v267, %v271
    %v275 = vsel %vm183, %v258, 0
    %277 = vmatprep.subr.mxu0 0.0
    %278 = vmatpush1.msra.mxu0 0.0
    %279 = vmatprep.subr.mxu0 0.0
    %280 = vmatpush1.msra.mxu0 0.0
    %281 = vmatprep.subr.mxu0 0.0
    %282 = vmatpush1.msra.mxu0 0.0
    %283 = vmatprep.subr.mxu0 0.0
    %284 = vmatpush1.msra.mxu0 0.0
    %285 = vmatprep.subr.mxu0 0.0
    %286 = vmatpush1.msra.mxu0 0.0
    %287 = vmatprep.subr.mxu0 0.0
    %288 = vmatpush1.msra.mxu0 0.0
    %289 = vmatprep.subr.mxu0 0.0
    %290 = vmatpush1.msra.mxu0 0.0
    %291 = vmatprep.subr.mxu0 0.0
    %292 = vmatpush1.msra.mxu0 0.0
    %293 = vmatprep.subr.mxu0 0.0
    %294 = vmatpush1.msra.mxu0 %v266
    %295 = vmatprep.subr.mxu0 0.0
    %296 = vmatpush1.msra.mxu0 %v265
    %297 = vmatprep.subr.mxu0 0.0
    %298 = vmatpush1.msra.mxu0 %v264
    %299 = vmatprep.subr.mxu0 0.0
    %300 = vmatpush1.msra.mxu0 %v263
    %301 = vmatprep.subr.mxu0 0.0
    %302 = vmatpush1.msra.mxu0 %v262
    %303 = vmatprep.subr.mxu0 0.0
    %304 = vmatpush1.msra.mxu0 %v261
    %305 = vmatprep.subr.mxu0 0.0
    %306 = vmatpush1.msra.mxu0 %v260
    %307 = vmatprep.subr.mxu0 0.0
    %308 = vmatpush1.msra.mxu0 %v259
    %309 = vmatprep.subr.mxu0 0.0
    %310 = vmatpush2.msra.mxu0 0.0
    %311 = vmatprep.subr.mxu0 0.0
    %312 = vmatpush2.msra.mxu0 0.0
    %313 = vmatprep.subr.mxu0 0.0
    %314 = vmatpush2.msra.mxu0 0.0
    %315 = vmatprep.subr.mxu0 0.0
    %316 = vmatpush2.msra.mxu0 0.0
    %317 = vmatprep.subr.mxu0 0.0
    %318 = vmatpush2.msra.mxu0 0.0
    %319 = vmatprep.subr.mxu0 0.0
    %320 = vmatpush2.msra.mxu0 0.0
    %321 = vmatprep.subr.mxu0 0.0
    %322 = vmatpush2.msra.mxu0 0.0
    %323 = vmatprep.subr.mxu0 0.0
    %324 = vmatpush2.msra.mxu0 0.0
    %325 = vmatprep.subr.mxu0 0.0
    %326 = vmatpush2.msra.mxu0 0.0
    %327 = vmatprep.subr.mxu0 0.0
    %328 = vmatpush2.msra.mxu0 0.0
    %329 = vmatprep.subr.mxu0 0.0
    %330 = vmatpush2.msra.mxu0 0.0
    %331 = vmatprep.subr.mxu0 0.0
    %332 = vmatpush2.msra.mxu0 0.0
    %333 = vmatprep.subr.mxu0 0.0
    %334 = vmatpush2.msra.mxu0 0.0
    %335 = vmatprep.subr.mxu0 0.0
    %336 = vmatpush2.msra.mxu0 0.0
    %337 = vmatprep.subr.mxu0 0.0
    %338 = vmatpush2.msra.mxu0 0.0
    %339 = vmatprep.subr.mxu0 0.0
    %340 = vmatpush2.msra.mxu0 0.0
    %341 = vmatprep.mubr.f32.mxu0 0.0
    %342 = vmatmul.mubr.f32.gmra.mxu0 %v275
    %v343 = vpop.f32.mrf.mxu0
    %v344 = vadd.f32 %v272, %v343
    %v345 = vpop.f32.mrf.mxu0
    %346 = vdwg.mxu0
    %347 = vst [vmem:[#allocation10] sm:$0xff] %v344
    // Predicated region
    $region46: #{tpu_custom_call.1} parent=1 // pred_check
      _
    $region47: #{tpu_custom_call.1} parent=1 // pred_check_branch
      %349 = sbr.rel (0) target = $region49
    $region48: #{tpu_custom_call.1} parent=1 // pred_region
      %s351 = ssub.s32 128, 128
      %352 = vsyncadd [#allocation4], %s351
      %s354 = sshll.u32 [#allocation10], 4
      %s355 = int_to_ptr.vmem [resolvable:$true] %s354
      %357 = dma.vmem_to_hbm [thread:$0]  %s355, 128, %s7, [#allocation4]
    $region49: #{tpu_custom_call.1} parent=1 // pred_fallthru
      _
    // Predicated region
    $region50: #{tpu_custom_call.1} parent=1 // pred_check
      _
    $region51: #{tpu_custom_call.1} parent=1 // pred_check_branch
      %359 = sbr.rel (0) target = $region53
    $region52: #{tpu_custom_call.1} parent=1 // pred_region
      %360 = dma.done [#allocation4], 128
    $region53: #{tpu_custom_call.1} parent=1 // pred_fallthru
      _
    %361 = vsyncpa [#allocation3], 1
    %362 = vsyncpa [#allocation6], 1
    %363 = vsyncpa [#allocation9], 1
    %364 = vsyncpa [#allocation4], 1

</llo_original>
